<compile_context>
chip_gen: v6e
topology: v6e:2x2x1
jax: 0.10.0
libtpu: 0.0.40
codegen_flags: <defaults>
</compile_context>

<pallas_src>
import jax
import jax.numpy as jnp
from jax.experimental import pallas as pl
from jax.experimental.pallas import tpu as pltpu

_EPS = 1e-12                              # torch.nn.functional.normalize default eps
_VMEM_TARGET_BYTES = 16 * 1024 * 1024     # target total VMEM footprint (safe on v7x's 64 MiB)
_VMEM_MARGIN_BYTES = 8 * 1024 * 1024      # headroom for Mosaic internal scratch
_VMEM_FALLBACK_BYTES = 32 * 1024 * 1024   # if even the minimum tile exceeds this, fall back


def _round_up(a: int, b: int) -> int:
    return ((a + b - 1) // b) * b


def _sublane_multiple(dtype) -> int:
    """Row-tile granularity so packed sublanes stay unmasked."""
    itemsize = jnp.dtype(dtype).itemsize
    return {4: 8, 2: 16, 1: 32}.get(itemsize, 8)


def _l2_normalize_kernel(x_ref, o_ref):
    # x_ref / o_ref: (row_tile, F) VMEM tiles.  Math is strictly per-row, so any
    # garbage rows of a ragged last block never contaminate valid rows (their
    # writes are discarded by Pallas).
    x = x_ref[...].astype(jnp.float32)
    sq_sum = jnp.sum(x * x, axis=-1, keepdims=True)            # (row_tile, 1)
    # rsqrt(max(ss, eps^2)) == 1 / max(sqrt(ss), eps)  (eps^2 is a normal f32)
    inv = jax.lax.rsqrt(jnp.maximum(sq_sum, _EPS * _EPS))
    o_ref[...] = (x * inv).astype(o_ref.dtype)


def _l2_normalize_ref(x, out_dtype):
    xf = x.astype(jnp.float32)
    norm = jnp.sqrt(jnp.sum(xf * xf, axis=1, keepdims=True))
    return (xf / jnp.maximum(norm, _EPS)).astype(out_dtype)


@jax.jit
def l2_normalize(x):
    """Row-wise L2 normalization (F.normalize(x, p=2, dim=1)) via Pallas."""
    n, f = x.shape
    in_dtype = x.dtype
    out_dtype = in_dtype if jnp.issubdtype(in_dtype, jnp.floating) else jnp.float32
    in_itemsize = jnp.dtype(in_dtype).itemsize
    out_itemsize = jnp.dtype(out_dtype).itemsize
    sublane = max(_sublane_multiple(in_dtype), _sublane_multiple(out_dtype))

    if n == 0 or f == 0 or n < sublane:
        # Degenerate / tiny inputs: a single tiny block has no kernel benefit.
        return _l2_normalize_ref(x, out_dtype)

    # Per-row VMEM footprint for one grid step: 2x double-buffered input tile +
    # 2x double-buffered output tile + ~2 f32 compute temporaries.
    bytes_per_row = f * (2 * in_itemsize + 2 * out_itemsize + 2 * 4)

    if sublane * bytes_per_row > _VMEM_FALLBACK_BYTES:
        # TODO(synk): extremely wide feature dims need a 2-D grid with a
        # feature-axis reduction accumulator; fall back to plain XLA for now.
        return _l2_normalize_ref(x, out_dtype)

    # Largest row tile that fits the footprint target, rounded to sublane packing.
    rt = max(sublane, (_VMEM_TARGET_BYTES // bytes_per_row) // sublane * sublane)
    rt = min(rt, _round_up(n, sublane))

    # Balance the parallel grid axis across TensorCores (v7x has 2 TCs):
    # prefer >= 4 grid steps, and an even step count, when N allows it.
    if n >= 4 * sublane:
        min_steps = 4
    elif n >= 2 * sublane:
        min_steps = 2
    else:
        min_steps = 1
    rt = min(rt, _round_up(pl.cdiv(n, min_steps), sublane))
    steps = pl.cdiv(n, rt)
    if steps > 1 and steps % 2 == 1:
        rt_even = _round_up(pl.cdiv(n, steps + 1), sublane)
        if rt_even >= sublane and pl.cdiv(n, rt_even) % 2 == 0:
            rt = rt_even
            steps = pl.cdiv(n, rt)

    vmem_limit = int(min(rt * bytes_per_row + _VMEM_MARGIN_BYTES, 48 * 1024 * 1024))

    # No pad / slice: grid covers ceil(n / rt) row blocks; the feature block dim
    # is the full width f (allowed: equals the array dim); Pallas masks the
    # ragged last row block.
    out = pl.pallas_call(
        _l2_normalize_kernel,
        out_shape=jax.ShapeDtypeStruct((n, f), out_dtype),
        grid_spec=pltpu.PrefetchScalarGridSpec(
            num_scalar_prefetch=0,
            grid=(steps,),
            in_specs=[pl.BlockSpec((rt, f), lambda i: (i, 0))],
            out_specs=pl.BlockSpec((rt, f), lambda i: (i, 0)),
        ),
        compiler_params=pltpu.CompilerParams(
            dimension_semantics=("parallel",),
            vmem_limit_bytes=vmem_limit,
        ),
        cost_estimate=pl.CostEstimate(
            flops=3 * n * f,
            transcendentals=n,
            bytes_accessed=n * f * (in_itemsize + out_itemsize),
        ),
    )(x)
    return out


class NormalizeTransform:
    """JAX counterpart of the grafog Normalize nn.Module.

    Takes a dict mimicking torch_geometric.data.Data and returns a new dict
    with x L2-normalized per node; everything else passes through unchanged.
    """

    def __call__(self, data):
        new_data = dict(data)
        new_data["x"] = l2_normalize(data["x"])
        return new_data


if __name__ == "__main__":
    key = jax.random.PRNGKey(0)
    k_x, k_y, k_e = jax.random.split(key, 3)

    num_nodes, num_feats, num_edges, num_classes = 16, 32, 24, 4

    x = jax.random.normal(k_x, (num_nodes, num_feats), dtype=jnp.float32)
    y = jax.random.randint(k_y, (num_nodes,), 0, num_classes, dtype=jnp.int32)
    edge_index = jax.random.randint(k_e, (2, num_edges), 0, num_nodes, dtype=jnp.int32)
    train_mask = jnp.arange(num_nodes) < (num_nodes // 2)
    test_mask = jnp.logical_not(train_mask)

    data = {
        "x": x,
        "y": y,
        "edge_index": edge_index,
        "train_mask": train_mask,
        "test_mask": test_mask,
    }

    out = NormalizeTransform()(data)
    x_norm = jax.block_until_ready(out["x"])

    # Reference check against plain-JAX F.normalize semantics.
    ref = x / jnp.maximum(jnp.linalg.norm(x, ord=2, axis=1, keepdims=True), _EPS)
    assert x_norm.shape == x.shape
    assert jnp.allclose(x_norm, ref, atol=1e-6, rtol=1e-6)
    assert out["y"].shape == (num_nodes,)
    assert out["edge_index"].shape == (2, num_edges)

    # Awkward (non-multiple) node count and a non-128-multiple feature dim:
    # exercised with NO pad/slice — Pallas masks the ragged last row block.
    x2 = jax.random.normal(k_e, (1433, 37), dtype=jnp.float32)
    ref2 = x2 / jnp.maximum(jnp.linalg.norm(x2, ord=2, axis=1, keepdims=True), _EPS)
    out2 = jax.block_until_ready(l2_normalize(x2))
    assert out2.shape == x2.shape
    assert jnp.allclose(out2, ref2, atol=1e-6, rtol=1e-6)

    # bf16 path (packed sublanes, 16-row granularity).
    x3 = jax.random.normal(k_y, (271, 64), dtype=jnp.float32).astype(jnp.bfloat16)
    x3f = x3.astype(jnp.float32)
    ref3 = (x3f / jnp.maximum(jnp.linalg.norm(x3f, axis=1, keepdims=True), _EPS)).astype(jnp.bfloat16)
    out3 = jax.block_until_ready(l2_normalize(x3))
    assert out3.dtype == jnp.bfloat16 and out3.shape == x3.shape
    assert jnp.allclose(out3.astype(jnp.float32), ref3.astype(jnp.float32), atol=2e-2, rtol=2e-2)

    print("KERNEL_OK")
</pallas_src>

<mosaic_0001>
module attributes {stable_mosaic.version = 11 : i64} {
  func.func @_l2_normalize_kernel(%arg0: i32, %arg1: memref<8x32xf32, #tpu.memory_space<vmem>>, %arg2: memref<8x32xf32, #tpu.memory_space<vmem>>) attributes {dimension_semantics = [#tpu.dimension_semantics<parallel>], iteration_bounds = array<i64: 2>, scalar_prefetch = 0 : i64, scratch_operands = 0 : i64, tpu.core_type = #tpu.core_type<tc>, window_params = [{transform_indices = @transform_0, window_bounds = array<i64: 8, 32>}, {transform_indices = @transform_1, window_bounds = array<i64: 8, 32>}]} {
    %c0 = arith.constant 0 : index
    %c0_0 = arith.constant 0 : index
    %0 = vector.load %arg1[%c0, %c0_0] : memref<8x32xf32, #tpu.memory_space<vmem>>, vector<8x32xf32>
    %1 = arith.mulf %0, %0 : vector<8x32xf32>
    %cst = arith.constant dense<0.000000e+00> : vector<8xf32>
    %2 = vector.multi_reduction <add>, %1, %cst [1] : vector<8x32xf32> to vector<8xf32>
    %3 = vector.shape_cast %2 : vector<8xf32> to vector<8x1xf32>
    %cst_1 = arith.constant 1.000000e-24 : f32
    %4 = vector.broadcast %cst_1 : f32 to vector<8x1xf32>
    %5 = arith.maximumf %3, %4 : vector<8x1xf32>
    %6 = math.rsqrt %5 : vector<8x1xf32>
    %7 = vector.broadcast %6 : vector<8x1xf32> to vector<8x32xf32>
    %8 = arith.mulf %0, %7 : vector<8x32xf32>
    %c0_2 = arith.constant 0 : index
    %c0_3 = arith.constant 0 : index
    %9 = vector.load %arg2[%c0_2, %c0_3] : memref<8x32xf32, #tpu.memory_space<vmem>>, vector<8x32xf32>
    tpu.vector_store %arg2[%c0_2, %c0_3], %8 {strides = array<i32>} : memref<8x32xf32, #tpu.memory_space<vmem>>, vector<8x32xf32>,
    return
  }
  func.func @transform_0(%arg0: i32) -> (i32, i32) {
    %c0_i32 = arith.constant 0 : i32
    %c0_i32_0 = arith.constant 0 : i32
    return %arg0, %c0_i32 : i32, i32
  }
  func.func @transform_1(%arg0: i32) -> (i32, i32) {
    %c0_i32 = arith.constant 0 : i32
    %c0_i32_0 = arith.constant 0 : i32
    return %arg0, %c0_i32 : i32, i32
  }
}

</mosaic_0001>

<llo_original>
// kernel: l2_normalize.1
$region0: #{l2_normalize.1}
  #allocation0 [shape = 'u32[]', space=smem, size = 0x4, offset = 0x4, fixed_abs, tag = 'smem constant byte address 0x4 - core index']
  #allocation1 [shape = 'u32[144,128]{1,0:T(1,128)}', space=vmem, size = 0x12000, scoped, tag = 'internal scratch']
  %s0 = inlined_call_operand.hbm [shape: f32[16,32], index: 0, kind: input, shape index: {}]
  %s1 = inlined_call_operand.hbm [shape: f32[16,32], index: 1, kind: output, shape index: {}]
  %s2 = sld [smem:[#allocation0]]
  $region41: #{l2_normalize.1} parent=0
    _
  %s4 = ssub.s32 1, %s2
  %s5 = scalar_select 0, %s4, %s2
  $region1: #{l2_normalize.1} parent=0
    #allocation2 [shape = 'u8[8192]{0}', space=vmem, size = 0x2000, scoped, tag = 'input window, operand 0']
    #allocation3 [shape = 's32[2]{0}', space=sflag, size = 0x8, scoped, tag = 'scoped memory for l2_normalize.1']
    #allocation4 [shape = 's32[2]{0}', space=sflag, size = 0x8, scoped, tag = 'scoped memory for l2_normalize.1']
    #allocation5 [shape = 'u8[8192]{0}', space=vmem, size = 0x2000, scoped, tag = 'output window, operand 0']
    %6 = vsyncpa [#allocation3], 0
    %s7 = scalar_lea.sflag [#allocation3], 1
    %8 = vsyncpa %s7, 0
    %9 = vsyncpa [#allocation4], 0
    %s10 = scalar_lea.sflag [#allocation4], 1
    %11 = vsyncpa %s10, 0
    loop: start=0, step=1, limit=4
    $region2: #{l2_normalize.1} parent=1 // loop_pre_header
      _
    $region3: #{l2_normalize.1} parent=1 // loop_header
      %s13 = sphi 0, %s17
      %p14 = scmp.ge.s32.totalorder %s13, 4
      %s23 = sphi 0, %s25
      %s26 = sphi 0, %s23
      %s27 = sphi 0, %s26
      %s43 = sphi 0, %s27
      %s49 = sphi 0, %s51
      %s52 = sphi 0, %s49
      %s53 = sphi 0, %s52
      %s69 = sphi 0, %s53
    $region4: #{l2_normalize.1} parent=1 // loop_header_branch
      %16 = sbr.rel (%p14) target = $region8
    $region5: #{l2_normalize.1} parent=1 // loop_body
      %s18 = ssub.s32 %s13, 1
      %s19 = ssub.s32 %s13, 2
      %s20 = sadd.s32 %s13, 1
      %s21 = ssub.s32 %s13, %s20
      %p22 = scmp.eq.s32.totalorder %s21, 0
      %s24 = sadd.s32 %s23, 1
      %s25 = scalar_select %p22, %s23, %s24
      %p28 = pneg %p22
      %p29 = scmp.eq.s32.totalorder %s13, 1
      %p30 = por %p28, %p29
      %p31 = scmp.ne.s32.totalorder %s23, %s26
      %p32 = scmp.eq.s32.totalorder %s13, 0
      %p33 = por %p31, %p32
      %p34 = scmp.ne.s32.totalorder %s23, %s26
      %p35 = scmp.eq.s32.totalorder %s18, 1
      %p36 = por %p34, %p35
      %p37 = scmp.ne.s32.totalorder %s26, %s27
      %p38 = scmp.eq.s32.totalorder %s18, 0
      %p39 = por %p37, %p38
      %p40 = scmp.ne.s32.totalorder %s26, %s27
      %p41 = scmp.eq.s32.totalorder %s19, 1
      %p42 = por %p40, %p41
      %p44 = scmp.ne.s32.totalorder %s27, %s43
      %p45 = scmp.eq.s32.totalorder %s19, 0
      %p46 = por %p44, %p45
      %s47 = ssub.s32 %s13, %s20
      %p48 = scmp.eq.s32.totalorder %s47, 0
      %s50 = sadd.s32 %s49, 1
      %s51 = scalar_select %p48, %s49, %s50
      %p54 = pneg %p48
      %p55 = scmp.eq.s32.totalorder %s13, 1
      %p56 = por %p54, %p55
      %p57 = scmp.ne.s32.totalorder %s49, %s52
      %p58 = scmp.eq.s32.totalorder %s13, 0
      %p59 = por %p57, %p58
      %p60 = scmp.ne.s32.totalorder %s49, %s52
      %p61 = scmp.eq.s32.totalorder %s18, 1
      %p62 = por %p60, %p61
      %p63 = scmp.ne.s32.totalorder %s52, %s53
      %p64 = scmp.eq.s32.totalorder %s18, 0
      %p65 = por %p63, %p64
      %p66 = scmp.ne.s32.totalorder %s52, %s53
      %p67 = scmp.eq.s32.totalorder %s19, 1
      %p68 = por %p66, %p67
      %p70 = scmp.ne.s32.totalorder %s53, %s69
      %p71 = scmp.eq.s32.totalorder %s19, 0
      %p72 = por %p70, %p71
      %p73 = scmp.le.s32.totalorder 1, %s13
      %p74 = scmp.lt.s32.totalorder %s13, 3
      %p75 = pnand %p73, %p74
      %p76 = pneg %p75
      // Predicated region
      $region9: #{l2_normalize.1} parent=5 // pred_check
        _
      $region10: #{l2_normalize.1} parent=5 // pred_check_branch
        %78 = sbr.rel (%p75) target = $region12
      $region11: #{l2_normalize.1} parent=5 // pred_region
        %s79 = ssub.s32 %s13, 1
      $region12: #{l2_normalize.1} parent=5 // pred_fallthru
        _
      %p80 = scmp.lt.s32.totalorder %s13, 2
      // Predicated region
      $region13: #{l2_normalize.1} parent=5 // pred_check
        %p81 = pneg %p80
      $region14: #{l2_normalize.1} parent=5 // pred_check_branch
        %83 = sbr.rel (%p81) target = $region16
      $region15: #{l2_normalize.1} parent=5 // pred_region
        // Predicated region
        $region17: #{l2_normalize.1} parent=15 // pred_check
          %p84 = pneg %p33
        $region18: #{l2_normalize.1} parent=15 // pred_check_branch
          %86 = sbr.rel (%p84) target = $region20
        $region19: #{l2_normalize.1} parent=15 // pred_region
          %s87 = sand.u32 %s23, 1
          %s88 = scalar_lea.sflag [#allocation3], %s87
          %s89 = sand.u32 %s23, 1
          %s90 = smul.addr %s89, 8
          %s91 = scalar_lea.vmem [#allocation2], %s90
          %s93 = ssub.s32 128, 128
          %94 = vsyncadd %s88, %s93
          %s95 = smul.addr %s13, 128
          %s96 = scalar_lea.hbm %s0, %s95
          %s98 = sshll.u32 %s91, 4
          %s99 = int_to_ptr.vmem [resolvable:$true] %s98
          %101 = dma.hbm_to_vmem [thread:$0]  %s96, 128, %s99, %s88
        $region20: #{l2_normalize.1} parent=15 // pred_fallthru
          _
      $region16: #{l2_normalize.1} parent=5 // pred_fallthru
        _
      %p102 = scmp.le.s32.totalorder 1, %s13
      %p103 = scmp.lt.s32.totalorder %s13, 3
      %p104 = pnand %p102, %p103
      %p105 = pneg %p104
      // Predicated region
      $region21: #{l2_normalize.1} parent=5 // pred_check
        _
      $region22: #{l2_normalize.1} parent=5 // pred_check_branch
        %107 = sbr.rel (%p104) target = $region24
      $region23: #{l2_normalize.1} parent=5 // pred_region
        %s108 = ssub.s32 %s13, 1
        %s109 = sand.u32 %s26, 1
        %s110 = scalar_lea.sflag [#allocation3], %s109
        %s111 = sand.u32 %s26, 1
        %s112 = smul.addr %s111, 8
        %s113 = scalar_lea.vmem [#allocation2], %s112
        // Predicated region
        $region25: #{l2_normalize.1} parent=23 // pred_check
          %p114 = pneg %p39
        $region26: #{l2_normalize.1} parent=23 // pred_check_branch
          %116 = sbr.rel (%p114) target = $region28
        $region27: #{l2_normalize.1} parent=23 // pred_region
          %117 = dma.done %s110, 128
        $region28: #{l2_normalize.1} parent=23 // pred_fallthru
          _
        %s118 = sand.u32 %s26, 1
        %s119 = scalar_lea.sflag [#allocation3], %s118
        %s120 = sand.u32 %s26, 1
        %s121 = smul.addr %s120, 8
        %s122 = scalar_lea.vmem [#allocation2], %s121
        %p123 = pneg %p39
        %p124 = pneg %p36
        %p125 = pneg %p65
        %p126 = pneg %p62
        %s127 = sand.u32 %s52, 1
        %s128 = scalar_lea.sflag [#allocation4], %s127
        %s129 = sand.u32 %s52, 1
        %s130 = smul.addr %s129, 8
        %s131 = scalar_lea.vmem [#allocation5], %s130
        %v132 = vld [vmem:[%s113] sm:$0xff]
        %v133 = vmul.f32 %v132, %v132
        %vm134 = vcmask 261120
        %v135 = vsel %vm134, %v133, 0.0
        %136 = vadd.xlane.f32.xlu0 %v135
        %v137 = vpop.xlane.xlu0 %136
        %v138 = vmax.f32 %v137, 1e-24
        %v139 = vrsqrt.pop %v138
        %v140 = vmul.f32 %v132, %v139
        %141 = vst.msk [vmem:[%s131] sm:$0xff] %vm134, %v140
        %s142 = sand.u32 %s52, 1
        %s143 = scalar_lea.sflag [#allocation4], %s142
        %s144 = sand.u32 %s52, 1
        %s145 = smul.addr %s144, 8
        %s146 = scalar_lea.vmem [#allocation5], %s145
        // Predicated region
        $region29: #{l2_normalize.1} parent=23 // pred_check
          %p147 = pneg %p62
        $region30: #{l2_normalize.1} parent=23 // pred_check_branch
          %149 = sbr.rel (%p147) target = $region32
        $region31: #{l2_normalize.1} parent=23 // pred_region
          %s151 = ssub.s32 128, 128
          %152 = vsyncadd %s143, %s151
          %s153 = smul.addr %s18, 128
          %s154 = scalar_lea.hbm %s1, %s153
          %s156 = sshll.u32 %s146, 4
          %s157 = int_to_ptr.vmem [resolvable:$true] %s156
          %159 = dma.vmem_to_hbm [thread:$0]  %s157, 128, %s154, %s143
        $region32: #{l2_normalize.1} parent=23 // pred_fallthru
          _
      $region24: #{l2_normalize.1} parent=5 // pred_fallthru
        _
      %p160 = scmp.le.s32.totalorder 2, %s13
      // Predicated region
      $region33: #{l2_normalize.1} parent=5 // pred_check
        %p161 = pneg %p160
      $region34: #{l2_normalize.1} parent=5 // pred_check_branch
        %163 = sbr.rel (%p161) target = $region36
      $region35: #{l2_normalize.1} parent=5 // pred_region
        %s164 = ssub.s32 %s13, 2
        // Predicated region
        $region37: #{l2_normalize.1} parent=35 // pred_check
          %p165 = pneg %p68
        $region38: #{l2_normalize.1} parent=35 // pred_check_branch
          %167 = sbr.rel (%p165) target = $region40
        $region39: #{l2_normalize.1} parent=35 // pred_region
          %s168 = sand.u32 %s53, 1
          %s169 = scalar_lea.sflag [#allocation4], %s168
          %s170 = sand.u32 %s53, 1
          %s171 = smul.addr %s170, 8
          %s172 = scalar_lea.vmem [#allocation5], %s171
          %173 = dma.done %s169, 128
        $region40: #{l2_normalize.1} parent=35 // pred_fallthru
          _
      $region36: #{l2_normalize.1} parent=5 // pred_fallthru
        _
    $region6: #{l2_normalize.1} parent=1 // loop_footer
      %s17 = sadd.s32 1, %s13
    $region7: #{l2_normalize.1} parent=1 // loop_footer_branch
      %12 = sbr.rel target = $region3
    $region8: #{l2_normalize.1} parent=1 // loop_exit
      _
    %174 = vsyncpa [#allocation3], 1
    %s175 = scalar_lea.sflag [#allocation3], 1
    %176 = vsyncpa %s175, 1
    %177 = vsyncpa [#allocation4], 1
    %s178 = scalar_lea.sflag [#allocation4], 1
    %179 = vsyncpa %s178, 1

</llo_original>
